<compile_context>
chip_gen: v7x
topology: tpu7x:2x2x1
jax: 0.10.0
libtpu: 0.0.40
codegen_flags: <defaults>
</compile_context>

<pallas_src>
import jax
import jax.numpy as jnp
from jax.experimental import pallas as pl
from jax.experimental.pallas import tpu as pltpu

_LANE = 128
_SUB = 8


def _cdiv(a, b):
    return -(-a // b)


def _round_up(a, b):
    return _cdiv(a, b) * b


def _narrow_dtype(dt):
    """Narrowest dtype we stream through the kernel (never up-cast in HBM)."""
    dt = jnp.dtype(dt)
    name = dt.name
    if name == "bool":
        return jnp.dtype("int8")
    if name == "float64":
        return jnp.dtype("float32")
    if name in ("int64", "uint64"):
        return jnp.dtype("int32")
    return dt


def _make_dice_kernel_chunked(nc, ch_blk, ch_total, nc_blk, needs_mask):
    """Main path.  Block = (nc, ch_blk, 128); fori_loop over 8-chunk groups.

    out_ref[0] = per-row, lane-folded sum of x * t   (intersection)
    out_ref[1] = per-row, lane-folded sum of x + t   (denominator)
    """
    n_groups = ch_blk // _SUB          # ch_blk is a multiple of 8 by construction

    def kernel(x_ref, t_ref, out_ref):
        ch_base = pl.program_id(0) * ch_blk
        if needs_mask:
            sub_iota = jax.lax.broadcasted_iota(jnp.int32, (1, _SUB, _LANE), 1)
        for lo in range(0, nc, nc_blk):          # bounded accumulator vregs
            rows = min(nc_blk, nc - lo)

            def body(s, carry):
                acc_i, acc_d = carry
                off = pl.multiple_of(s * _SUB, _SUB)
                xs = x_ref[lo:lo + rows, pl.ds(off, _SUB), :].astype(jnp.float32)
                ts = t_ref[lo:lo + rows, pl.ds(off, _SUB), :].astype(jnp.float32)
                if needs_mask:
                    # Zero BOTH the x*t and x+t contributions of invalid chunks.
                    valid = (ch_base + s * _SUB + sub_iota) < ch_total
                    xs = jnp.where(valid, xs, 0.0)
                    ts = jnp.where(valid, ts, 0.0)
                return acc_i + xs * ts, acc_d + (xs + ts)

            init = (jnp.zeros((rows, _SUB, _LANE), jnp.float32),
                    jnp.zeros((rows, _SUB, _LANE), jnp.float32))
            acc_i, acc_d = jax.lax.fori_loop(0, n_groups, body, init,
                                             unroll=min(2, n_groups))
            out_ref[0, lo:lo + rows, :] = jnp.sum(acc_i, axis=1)
            out_ref[1, lo:lo + rows, :] = jnp.sum(acc_d, axis=1)

    return kernel


def _make_dice_kernel_flat(nc, nchunks, cw, hw, nc_blk, needs_mask):
    """Fallback path (ragged or tiny HW).  Block = (nc, nchunks*cw), static loop."""
    t_lane = nchunks * cw

    def kernel(x_ref, t_ref, out_ref):
        tile_base = pl.program_id(0) * t_lane
        if needs_mask:
            lane_iota = jax.lax.broadcasted_iota(jnp.int32, (1, cw), 1)
        for lo in range(0, nc, nc_blk):
            rows = min(nc_blk, nc - lo)
            acc_i = jnp.zeros((rows, cw), jnp.float32)
            acc_d = jnp.zeros((rows, cw), jnp.float32)
            for c in range(nchunks):             # short static unroll (<= 32)
                xs = x_ref[lo:lo + rows, c * cw:(c + 1) * cw].astype(jnp.float32)
                ts = t_ref[lo:lo + rows, c * cw:(c + 1) * cw].astype(jnp.float32)
                if needs_mask:
                    valid = (tile_base + c * cw + lane_iota) < hw
                    xs = jnp.where(valid, xs, 0.0)
                    ts = jnp.where(valid, ts, 0.0)
                acc_i = acc_i + xs * ts
                acc_d = acc_d + (xs + ts)
            out_ref[0, lo:lo + rows, :] = acc_i
            out_ref[1, lo:lo + rows, :] = acc_d

    return kernel


def multiclass_dice_loss(inp, tgt, weights=None):
    """Pallas-TPU forward of MulticlassDiceLoss.  inp, tgt: (N, C, H, W)."""
    N, C, H, W = inp.shape
    assert tgt.shape == inp.shape, (inp.shape, tgt.shape)
    NC, HW = N * C, H * W

    x = inp.reshape(NC, HW)          # free reshape, no transpose
    t = tgt.reshape(NC, HW)
    xd, td = _narrow_dtype(x.dtype), _narrow_dtype(t.dtype)
    if x.dtype != xd:
        x = x.astype(xd)
    if t.dtype != td:
        t = t.astype(td)
    pair_bytes = x.dtype.itemsize + t.dtype.itemsize

    # ---- per-generation VMEM budget (v7x: 64 MiB, v5e/v6e: 128 MiB physical) ---
    vmem_cap = 64 * 1024 * 1024
    try:
        vmem_cap = int(getattr(pltpu.get_tpu_info(), "vmem_capacity_bytes", vmem_cap))
    except Exception:
        pass
    vmem_limit = min(int(vmem_cap * 0.70), 96 * 1024 * 1024)
    # 2 inputs x 2 pipeline buffers; keep ~25% of the scoped limit for the tiny
    # output blocks and Mosaic-internal scratch.
    block_elems = max(_SUB * _LANE,
                      min(((vmem_limit * 3) // 4) // (2 * pair_bytes),
                          4 * 1024 * 1024))

    ch_total = HW // _LANE
    use_chunked = (HW % _LANE == 0) and (ch_total >= _SUB)

    if use_chunked:
        # (NC, HW) -> (NC, HW//128, 128): still a free, contiguous reshape.
        x_in = x.reshape(NC, ch_total, _LANE)
        t_in = t.reshape(NC, ch_total, _LANE)
        ch_cap = max(_SUB, (block_elems // (NC * _LANE)) // _SUB * _SUB)
        ch_blk = min(ch_cap, (ch_total // _SUB) * _SUB)
        # Force >= 2 grid steps on big problems so v7x's 2nd TensorCore gets work.
        if ch_blk >= ch_total and NC * HW * pair_bytes > (4 << 20):
            ch_blk = max(_SUB, _round_up(_cdiv(ch_total, 2), _SUB))
        num_tiles = _cdiv(ch_total, ch_blk)
        needs_mask = (ch_total % ch_blk) != 0
        nc_blk = min(NC, _SUB)
        kernel = _make_dice_kernel_chunked(NC, ch_blk, ch_total, nc_blk, needs_mask)
        in_spec = pl.BlockSpec((NC, ch_blk, _LANE), lambda j: (0, j, 0))
        out_w = _LANE
    else:
        x_in, t_in = x, t
        if HW < _LANE:
            cw, nchunks, num_tiles, needs_mask = HW, 1, 1, False
        else:
            t_lane = max(_LANE, min((HW // _LANE) * _LANE, 32 * _LANE))
            cw, nchunks = _LANE, t_lane // _LANE
            num_tiles = _cdiv(HW, t_lane)
            needs_mask = (HW % t_lane) != 0
        nc_blk = min(NC, 32)
        kernel = _make_dice_kernel_flat(NC, nchunks, cw, HW, nc_blk, needs_mask)
        in_spec = pl.BlockSpec((NC, nchunks * cw), lambda j: (0, j))
        out_w = cw

    partial = pl.pallas_call(
        kernel,
        out_shape=jax.ShapeDtypeStruct((2, NC, out_w * num_tiles), jnp.float32),
        grid=(num_tiles,),
        in_specs=[in_spec, in_spec],
        out_specs=pl.BlockSpec((2, NC, out_w), lambda j: (0, 0, j)),
        compiler_params=pltpu.CompilerParams(
            dimension_semantics=("parallel",),
            vmem_limit_bytes=vmem_limit,
        ),
    )(x_in, t_in)

    # Cheap finalize on (2, NC) scalars in plain JAX (matches PyTorch reference).
    sums = jnp.sum(partial, axis=-1)               # (2, NC)
    inter = sums[0].reshape(N, C)                  # sum(x * t)       per (n, c)
    denom = sums[1].reshape(N, C)                  # sum(x) + sum(t)  per (n, c)
    smooth = jnp.float32(1.0)
    per_sample = 2.0 * (inter + smooth) / (denom + smooth)            # (N, C)
    per_class = 1.0 - jnp.sum(per_sample, axis=0) / jnp.float32(N)    # (C,)
    if weights is not None:
        per_class = per_class * jnp.asarray(weights, jnp.float32)
    return jnp.sum(per_class)


def _reference_loss(inp, tgt, weights=None):
    # Pure-JAX reproduction of the PyTorch forward (for verification).
    Nn, C, H, W = inp.shape
    total = jnp.float32(0.0)
    for i in range(C):
        xi = inp[:, i].reshape(Nn, -1)
        ti = tgt[:, i].reshape(Nn, -1)
        inter = (xi * ti).sum(1)
        l = 2.0 * (inter + 1.0) / (xi.sum(1) + ti.sum(1) + 1.0)
        l = 1.0 - l.sum() / Nn
        if weights is not None:
            l = l * weights[i]
        total = total + l
    return total


if __name__ == "__main__":
    key = jax.random.PRNGKey(0)
    k1, k2 = jax.random.split(key)

    N, C, H, W = 2, 4, 16, 16

    # "input": soft predictions (softmax probabilities), NCHW.
    logits = jax.random.normal(k1, (N, C, H, W), dtype=jnp.float32)
    inp = jax.nn.softmax(logits, axis=1)
    # "target": one-hot encoded labels, NCHW.
    labels = jax.random.randint(k2, (N, H, W), 0, C)
    tgt = jnp.transpose(jax.nn.one_hot(labels, C, dtype=jnp.float32),
                        (0, 3, 1, 2))

    # 1) unweighted
    loss = jax.block_until_ready(multiclass_dice_loss(inp, tgt))
    ref = _reference_loss(inp, tgt)
    assert jnp.allclose(loss, ref, rtol=1e-5, atol=1e-5), (loss, ref)

    # 2) per-class weights
    w = jnp.array([0.4, 0.3, 0.2, 0.1], jnp.float32)
    loss_w = jax.block_until_ready(multiclass_dice_loss(inp, tgt, w))
    ref_w = _reference_loss(inp, tgt, w)
    assert jnp.allclose(loss_w, ref_w, rtol=1e-5, atol=1e-5), (loss_w, ref_w)

    # 3) bf16 predictions (exercises the no-upcast / in-kernel cast path)
    loss_bf = jax.block_until_ready(
        multiclass_dice_loss(inp.astype(jnp.bfloat16), tgt))
    ref_bf = _reference_loss(inp.astype(jnp.bfloat16).astype(jnp.float32), tgt)
    assert jnp.allclose(loss_bf, ref_bf, rtol=2e-3, atol=2e-3), (loss_bf, ref_bf)

    # 4) larger, 128-aligned spatial extent: exercises the big-block chunked
    #    fori_loop path, the multi-tile grid and the >=2-tile split for v7x.
    N2, C2, H2, W2 = 2, 8, 256, 256
    kk1, kk2 = jax.random.split(jax.random.PRNGKey(1))
    inp2 = jax.nn.softmax(
        jax.random.normal(kk1, (N2, C2, H2, W2), jnp.float32), axis=1)
    lab2 = jax.random.randint(kk2, (N2, H2, W2), 0, C2)
    tgt2 = jnp.transpose(jax.nn.one_hot(lab2, C2, dtype=jnp.float32),
                         (0, 3, 1, 2))
    loss2 = jax.block_until_ready(multiclass_dice_loss(inp2, tgt2))
    ref2 = _reference_loss(inp2, tgt2)
    assert jnp.allclose(loss2, ref2, rtol=2e-3, atol=2e-3), (loss2, ref2)

    # 5) ragged spatial extents: exercise the masked fallback paths (no jnp.pad).
    for (N3, C3, H3, W3) in ((2, 3, 5, 7), (1, 3, 50, 100)):
        kk1, kk2 = jax.random.split(jax.random.PRNGKey(2))
        inp3 = jax.nn.softmax(
            jax.random.normal(kk1, (N3, C3, H3, W3), jnp.float32), axis=1)
        lab3 = jax.random.randint(kk2, (N3, H3, W3), 0, C3)
        tgt3 = jnp.transpose(jax.nn.one_hot(lab3, C3, dtype=jnp.float32),
                             (0, 3, 1, 2))
        loss3 = jax.block_until_ready(multiclass_dice_loss(inp3, tgt3))
        ref3 = _reference_loss(inp3, tgt3)
        assert jnp.allclose(loss3, ref3, rtol=1e-5, atol=1e-5), (loss3, ref3)

    print("KERNEL_OK")
</pallas_src>

<mosaic_0001>
module attributes {stable_mosaic.version = 11 : i64} {
  func.func @kernel(%arg0: i32, %arg1: memref<8x256xf32, #tpu.memory_space<vmem>>, %arg2: memref<8x256xf32, #tpu.memory_space<vmem>>, %arg3: memref<2x8x128xf32, #tpu.memory_space<vmem>>) attributes {dimension_semantics = [#tpu.dimension_semantics<parallel>], iteration_bounds = array<i64: 1>, scalar_prefetch = 0 : i64, scratch_operands = 0 : i64, tpu.core_type = #tpu.core_type<tc>, window_params = [{transform_indices = @transform_0, window_bounds = array<i64: 8, 256>}, {transform_indices = @transform_1, window_bounds = array<i64: 8, 256>}, {transform_indices = @transform_2, window_bounds = array<i64: 2, 8, 128>}]} {
    %cst = arith.constant 0.000000e+00 : f32
    %0 = vector.broadcast %cst : f32 to vector<8x128xf32>
    %cst_0 = arith.constant 0.000000e+00 : f32
    %1 = vector.broadcast %cst_0 : f32 to vector<8x128xf32>
    %c0 = arith.constant 0 : index
    %c0_1 = arith.constant 0 : index
    %2 = vector.load %arg1[%c0, %c0_1] : memref<8x256xf32, #tpu.memory_space<vmem>>, vector<8x128xf32>
    %c0_2 = arith.constant 0 : index
    %c0_3 = arith.constant 0 : index
    %3 = vector.load %arg2[%c0_2, %c0_3] : memref<8x256xf32, #tpu.memory_space<vmem>>, vector<8x128xf32>
    %4 = arith.mulf %2, %3 : vector<8x128xf32>
    %5 = arith.addf %0, %4 : vector<8x128xf32>
    %6 = arith.addf %2, %3 : vector<8x128xf32>
    %7 = arith.addf %1, %6 : vector<8x128xf32>
    %c0_4 = arith.constant 0 : index
    %c128 = arith.constant 128 : index
    %8 = vector.load %arg1[%c0_4, %c128] : memref<8x256xf32, #tpu.memory_space<vmem>>, vector<8x128xf32>
    %c0_5 = arith.constant 0 : index
    %c128_6 = arith.constant 128 : index
    %9 = vector.load %arg2[%c0_5, %c128_6] : memref<8x256xf32, #tpu.memory_space<vmem>>, vector<8x128xf32>
    %10 = arith.mulf %8, %9 : vector<8x128xf32>
    %11 = arith.addf %5, %10 : vector<8x128xf32>
    %12 = arith.addf %8, %9 : vector<8x128xf32>
    %13 = arith.addf %7, %12 : vector<8x128xf32>
    %c0_7 = arith.constant 0 : index
    %c0_8 = arith.constant 0 : index
    %c0_9 = arith.constant 0 : index
    %14 = vector.load %arg3[%c0_7, %c0_8, %c0_9] : memref<2x8x128xf32, #tpu.memory_space<vmem>>, vector<1x8x128xf32>
    %15 = vector.shape_cast %14 : vector<1x8x128xf32> to vector<8x128xf32>
    %16 = vector.shape_cast %11 : vector<8x128xf32> to vector<1x8x128xf32>
    tpu.vector_store %arg3[%c0_7, %c0_8, %c0_9], %16 {strides = array<i32>} : memref<2x8x128xf32, #tpu.memory_space<vmem>>, vector<1x8x128xf32>,
    %c1 = arith.constant 1 : index
    %c0_10 = arith.constant 0 : index
    %c0_11 = arith.constant 0 : index
    %17 = vector.load %arg3[%c1, %c0_10, %c0_11] : memref<2x8x128xf32, #tpu.memory_space<vmem>>, vector<1x8x128xf32>
    %18 = vector.shape_cast %17 : vector<1x8x128xf32> to vector<8x128xf32>
    %19 = vector.shape_cast %13 : vector<8x128xf32> to vector<1x8x128xf32>
    tpu.vector_store %arg3[%c1, %c0_10, %c0_11], %19 {strides = array<i32>} : memref<2x8x128xf32, #tpu.memory_space<vmem>>, vector<1x8x128xf32>,
    return
  }
  func.func @transform_0(%arg0: i32) -> (i32, i32) {
    %c0_i32 = arith.constant 0 : i32
    %c0_i32_0 = arith.constant 0 : i32
    return %c0_i32, %arg0 : i32, i32
  }
  func.func @transform_1(%arg0: i32) -> (i32, i32) {
    %c0_i32 = arith.constant 0 : i32
    %c0_i32_0 = arith.constant 0 : i32
    return %c0_i32, %arg0 : i32, i32
  }
  func.func @transform_2(%arg0: i32) -> (i32, i32, i32) {
    %c0_i32 = arith.constant 0 : i32
    %c0_i32_0 = arith.constant 0 : i32
    %c0_i32_1 = arith.constant 0 : i32
    return %c0_i32, %c0_i32_0, %arg0 : i32, i32, i32
  }
}

</mosaic_0001>

<llo_original>
// kernel: tpu_custom_call.1
$region0: #{tpu_custom_call.1}
  #allocation0 [shape = 'u32[]', space=smem, size = 0x4, offset = 0x4, fixed_abs, tag = 'smem constant byte address 0x4 - core index']
  #allocation1 [shape = 'u32[144,128]{1,0:T(1,128)}', space=vmem, size = 0x12000, scoped, tag = 'internal scratch']
  %s0 = inlined_call_operand.hbm [shape: f32[8,256], index: 0, kind: input, shape index: {}]
  %s1 = inlined_call_operand.hbm [shape: f32[8,256], index: 1, kind: input, shape index: {}]
  %s2 = inlined_call_operand.hbm [shape: f32[2,8,128], index: 2, kind: output, shape index: {}]
  %s3 = sld [smem:[#allocation0]]
  $region26: #{tpu_custom_call.1} parent=0
    _
  %s5 = ssub.s32 1, %s3
  %s6 = scalar_select 0, %s5, %s3
  $region1: #{tpu_custom_call.1} parent=0
    #allocation2 [shape = 'u8[8192]{0}', space=vmem, size = 0x2000, scoped, tag = 'input window, operand 0, single buffered']
    #allocation3 [shape = 's32[1]{0}', space=sflag, size = 0x4, scoped, tag = 'scoped memory for tpu_custom_call.1']
    #allocation4 [shape = 's32[1]{0}', space=sflag, size = 0x4, scoped, tag = 'scoped memory for tpu_custom_call.1']
    #allocation5 [shape = 'u8[8192]{0}', space=vmem, size = 0x2000, scoped, tag = 'input window, operand 1, single buffered']
    #allocation6 [shape = 's32[1]{0}', space=sflag, size = 0x4, scoped, tag = 'scoped memory for tpu_custom_call.1']
    #allocation7 [shape = 'u8[8192]{0}', space=vmem, size = 0x2000, scoped, tag = 'output window, operand 0, single buffered']
    %7 = vsyncpa [#allocation3], 0
    %8 = vsyncpa [#allocation6], 0
    %9 = vsyncpa [#allocation4], 0
    // Predicated region
    $region2: #{tpu_custom_call.1} parent=1 // pred_check
      _
    $region3: #{tpu_custom_call.1} parent=1 // pred_check_branch
      %11 = sbr.rel (0) target = $region5
    $region4: #{tpu_custom_call.1} parent=1 // pred_region
      %s13 = ssub.s32 256, 256
      %14 = vsyncadd [#allocation3], %s13
      %s16 = sshll.u32 [#allocation2], 4
      %s17 = int_to_ptr.vmem [resolvable:$true] %s16
      %19 = dma.hbm_to_vmem [thread:$0]  %s0, 256, %s17, [#allocation3]
    $region5: #{tpu_custom_call.1} parent=1 // pred_fallthru
      _
    // Predicated region
    $region6: #{tpu_custom_call.1} parent=1 // pred_check
      _
    $region7: #{tpu_custom_call.1} parent=1 // pred_check_branch
      %21 = sbr.rel (0) target = $region9
    $region8: #{tpu_custom_call.1} parent=1 // pred_region
      %s23 = ssub.s32 256, 256
      %24 = vsyncadd [#allocation6], %s23
      %s26 = sshll.u32 [#allocation5], 4
      %s27 = int_to_ptr.vmem [resolvable:$true] %s26
      %29 = dma.hbm_to_vmem [thread:$0]  %s1, 256, %s27, [#allocation6]
    $region9: #{tpu_custom_call.1} parent=1 // pred_fallthru
      _
    // Predicated region
    $region10: #{tpu_custom_call.1} parent=1 // pred_check
      _
    $region11: #{tpu_custom_call.1} parent=1 // pred_check_branch
      %31 = sbr.rel (0) target = $region13
    $region12: #{tpu_custom_call.1} parent=1 // pred_region
      %32 = dma.done [#allocation3], 256
    $region13: #{tpu_custom_call.1} parent=1 // pred_fallthru
      _
    // Predicated region
    $region14: #{tpu_custom_call.1} parent=1 // pred_check
      _
    $region15: #{tpu_custom_call.1} parent=1 // pred_check_branch
      %34 = sbr.rel (0) target = $region17
    $region16: #{tpu_custom_call.1} parent=1 // pred_region
      %35 = dma.done [#allocation6], 256
    $region17: #{tpu_custom_call.1} parent=1 // pred_fallthru
      _
    %v36 = vld [vmem:[#allocation2] sm:$0xff]
    %v37 = vld [vmem:[#allocation5] sm:$0xff]
    %v38 = vmul.f32 %v36, %v37
    %v39 = vadd.f32 %v38, 0.0
    %v40 = vadd.f32 %v36, %v37
    %v41 = vadd.f32 %v40, 0.0
    %v42 = vld [vmem:[#allocation2 + $0x8] sm:$0xff]
    %v43 = vld [vmem:[#allocation5 + $0x8] sm:$0xff]
    %v44 = vmul.f32 %v42, %v43
    %v45 = vadd.f32 %v39, %v44
    %v46 = vadd.f32 %v42, %v43
    %v47 = vadd.f32 %v41, %v46
    %48 = vst [vmem:[#allocation7] sm:$0xff] %v45
    %s49 = scalar_lea.vmem [#allocation7], 8
    %50 = vst [vmem:[%s49] sm:$0xff] %v47
    // Predicated region
    $region18: #{tpu_custom_call.1} parent=1 // pred_check
      _
    $region19: #{tpu_custom_call.1} parent=1 // pred_check_branch
      %52 = sbr.rel (0) target = $region21
    $region20: #{tpu_custom_call.1} parent=1 // pred_region
      %s54 = ssub.s32 256, 256
      %55 = vsyncadd [#allocation4], %s54
      %s56 = sshll.u32 [#allocation7], 4
      %s57 = int_to_ptr.vmem [resolvable:$true] %s56
      %62 = dma.vmem_to_hbm [thread:$0]  %s57, 256, %s2, [#allocation4], 128, 128, 8
    $region21: #{tpu_custom_call.1} parent=1 // pred_fallthru
      _
    // Predicated region
    $region22: #{tpu_custom_call.1} parent=1 // pred_check
      _
    $region23: #{tpu_custom_call.1} parent=1 // pred_check_branch
      %64 = sbr.rel (0) target = $region25
    $region24: #{tpu_custom_call.1} parent=1 // pred_region
      %65 = dma.done [#allocation4], 256
    $region25: #{tpu_custom_call.1} parent=1 // pred_fallthru
      _
    %66 = vsyncpa [#allocation3], 1
    %67 = vsyncpa [#allocation6], 1
    %68 = vsyncpa [#allocation4], 1

</llo_original>
